<compile_context>
chip_gen: v7x
topology: tpu7x:2x2x1
jax: 0.10.0
libtpu: 0.0.40
codegen_flags: <defaults>
</compile_context>

<pallas_src>
import functools

import jax
import jax.numpy as jnp
from jax import lax
from jax.experimental import pallas as pl
from jax.experimental.pallas import tpu as pltpu

_LANES = 128
_SUBLANES = 8
# 2048 rows x 128 lanes x 4 B = 1 MiB per f32 tile -> ~4 MiB with in+out
# double-buffering; comfortably inside scoped VMEM on v5e / v6e / v7x.
_MAX_TILE_ROWS = 2048

_TWO_PI = 2.0 * 3.14159265358979323846
_INV_2POW24 = 1.0 / float(1 << 24)


def _mix32(x):
    """lowbias32 integer mixer: uint32 -> well-avalanched uint32."""
    x = x ^ (x >> jnp.uint32(16))
    x = x * jnp.uint32(0x7FEB352D)
    x = x ^ (x >> jnp.uint32(15))
    x = x * jnp.uint32(0x846CA68B)
    x = x ^ (x >> jnp.uint32(16))
    return x


def _bits_to_unit_open(bits):
    """uint32 -> float32 uniform in the open interval (0, 1)."""
    return ((bits >> jnp.uint32(8)).astype(jnp.float32) + 0.5) * jnp.float32(
        _INV_2POW24)


def _gaussian_noise_kernel(seed_ref, x_ref, o_ref, *, mean, stddev, tile_rows):
    half = tile_rows // 2
    pairs_per_block = half * _LANES

    # Globally unique pair index (one uniform pair -> two independent normals).
    row = lax.broadcasted_iota(jnp.int32, (half, _LANES), 0)
    col = lax.broadcasted_iota(jnp.int32, (half, _LANES), 1)
    pair = row * _LANES + col
    gpair = pl.program_id(0) * pairs_per_block + pair

    # Seed-dependent counter stream; two distinct counters per pair.
    kmix = _mix32(seed_ref[0].astype(jnp.uint32))
    c = gpair.astype(jnp.uint32) * jnp.uint32(2) + kmix
    bits1 = _mix32(c)
    bits2 = _mix32(c + jnp.uint32(1))

    u1 = _bits_to_unit_open(bits1)
    u2 = _bits_to_unit_open(bits2)

    # Box-Muller, using both the cos and sin branch (halves EUP work).
    r = jnp.sqrt(jnp.float32(-2.0) * jnp.log(u1))
    theta = jnp.float32(_TWO_PI) * u2
    z1 = r * jnp.cos(theta)
    z2 = r * jnp.sin(theta)
    z = jnp.concatenate([z1, z2], axis=0)          # (tile_rows, 128)

    noise = jnp.float32(mean) + jnp.float32(stddev) * z
    o_ref[...] = (x_ref[...].astype(jnp.float32) + noise).astype(o_ref.dtype)


def gaussian_noise(x, *, stddev, mean=0.0, seed=0, training=True):
    """GaussianNoise forward. Elementwise, works for any shape/dtype."""
    if not training:
        return x

    orig_shape = x.shape
    orig_dtype = x.dtype
    n = x.size

    tile_elems = _SUBLANES * _LANES                # one (8, 128) grain
    if n % tile_elems == 0:
        # Fast path: free reshape, no extra HBM traffic.
        n_pad = n
        x_flat = jnp.ravel(x)
    else:
        # Ragged fallback: pad the flat tensor to the (8, 128) grain.
        # TODO(synk): mask the tail block in-kernel instead of padding in HBM.
        n_pad = ((n + tile_elems - 1) // tile_elems) * tile_elems
        x_flat = jnp.concatenate(
            [jnp.ravel(x), jnp.zeros((n_pad - n,), dtype=orig_dtype)])

    rows = n_pad // _LANES
    tile_rows = min(rows, _MAX_TILE_ROWS)
    grid = (pl.cdiv(rows, tile_rows),)

    seed_arr = jnp.asarray([seed], dtype=jnp.int32)
    kernel = functools.partial(
        _gaussian_noise_kernel,
        mean=float(mean), stddev=float(stddev), tile_rows=tile_rows)

    x2d = x_flat.reshape(rows, _LANES)
    out2d = pl.pallas_call(
        kernel,
        out_shape=jax.ShapeDtypeStruct((rows, _LANES), orig_dtype),
        grid=grid,
        in_specs=[
            pl.BlockSpec(memory_space=pltpu.SMEM),                # seed scalar
            pl.BlockSpec((tile_rows, _LANES), lambda i: (i, 0)),  # x tile
        ],
        out_specs=pl.BlockSpec((tile_rows, _LANES), lambda i: (i, 0)),
        compiler_params=pltpu.CompilerParams(
            dimension_semantics=("parallel",)),
    )(seed_arr, x2d)

    if n_pad != n:
        return out2d.reshape(-1)[:n].reshape(orig_shape)
    return out2d.reshape(orig_shape)


if __name__ == "__main__":
    key = jax.random.PRNGKey(0)
    # NCHW input, consistent with a conv-style feature map.
    x = jax.random.normal(key, (2, 4, 16, 16), dtype=jnp.float32)

    stddev = 0.1
    mean = 0.0

    # Training mode: x + Gaussian noise.
    y_train = gaussian_noise(x, stddev=stddev, mean=mean, seed=42,
                             training=True)
    y_train = jax.block_until_ready(y_train)

    # Eval mode: identity.
    y_eval = gaussian_noise(x, stddev=stddev, mean=mean, seed=42,
                            training=False)
    y_eval = jax.block_until_ready(y_eval)

    assert y_train.shape == x.shape and y_train.dtype == x.dtype
    assert bool(jnp.all(y_eval == x))

    # Sanity check on the injected noise statistics.
    noise = y_train - x
    noise_mean = float(jnp.mean(noise))
    noise_std = float(jnp.std(noise))
    assert abs(noise_mean - mean) < 0.05, noise_mean
    assert abs(noise_std - stddev) < 0.05, noise_std

    # Different seeds must produce different noise.
    y_train2 = jax.block_until_ready(
        gaussian_noise(x, stddev=stddev, mean=mean, seed=43, training=True))
    assert not bool(jnp.all(y_train2 == y_train))

    print("KERNEL_OK")
</pallas_src>

<mosaic_0001>
module attributes {stable_mosaic.version = 11 : i64} {
  func.func @_gaussian_noise_kernel(%arg0: i32, %arg1: memref<1xi32, #tpu.memory_space<smem>>, %arg2: memref<16x128xf32, #tpu.memory_space<vmem>>, %arg3: memref<16x128xf32, #tpu.memory_space<vmem>>) attributes {dimension_semantics = [#tpu.dimension_semantics<parallel>], iteration_bounds = array<i64: 1>, scalar_prefetch = 0 : i64, scratch_operands = 0 : i64, tpu.core_type = #tpu.core_type<tc>, window_params = [{transform_indices = @transform_0, window_bounds = array<i64: 1>}, {transform_indices = @transform_1, window_bounds = array<i64: 16, 128>}, {transform_indices = @transform_2, window_bounds = array<i64: 16, 128>}]} {
    %0 = tpu.iota {dimensions = array<i32: 0>} : vector<8x128xi32>
    %1 = tpu.iota {dimensions = array<i32: 1>} : vector<8x128xi32>
    %c128_i32 = arith.constant 128 : i32
    %2 = vector.broadcast %c128_i32 : i32 to vector<8x128xi32>
    %3 = arith.muli %0, %2 : vector<8x128xi32>
    %4 = arith.addi %3, %1 : vector<8x128xi32>
    %c1024_i32 = arith.constant 1024 : i32
    %5 = arith.muli %arg0, %c1024_i32 : i32
    %6 = vector.broadcast %5 : i32 to vector<8x128xi32>
    %7 = arith.addi %6, %4 : vector<8x128xi32>
    %c0 = arith.constant 0 : index
    %8 = memref.load %arg1[%c0] : memref<1xi32, #tpu.memory_space<smem>>
    %c16_i32 = arith.constant 16 : i32
    %9 = arith.shrui %8, %c16_i32 : i32
    %10 = arith.xori %8, %9 : i32
    %c2146121005_i32 = arith.constant 2146121005 : i32
    %11 = arith.muli %10, %c2146121005_i32 : i32
    %c15_i32 = arith.constant 15 : i32
    %12 = arith.shrui %11, %c15_i32 : i32
    %13 = arith.xori %11, %12 : i32
    %c-2073254261_i32 = arith.constant -2073254261 : i32
    %14 = arith.muli %13, %c-2073254261_i32 : i32
    %c16_i32_0 = arith.constant 16 : i32
    %15 = arith.shrui %14, %c16_i32_0 : i32
    %16 = arith.xori %14, %15 : i32
    %c2_i32 = arith.constant 2 : i32
    %17 = vector.broadcast %c2_i32 : i32 to vector<8x128xi32>
    %18 = arith.muli %7, %17 : vector<8x128xi32>
    %19 = vector.broadcast %16 : i32 to vector<8x128xi32>
    %20 = arith.addi %18, %19 : vector<8x128xi32>
    %c16_i32_1 = arith.constant 16 : i32
    %21 = vector.broadcast %c16_i32_1 : i32 to vector<8x128xi32>
    %22 = arith.shrui %20, %21 : vector<8x128xi32>
    %23 = arith.xori %20, %22 : vector<8x128xi32>
    %c2146121005_i32_2 = arith.constant 2146121005 : i32
    %24 = vector.broadcast %c2146121005_i32_2 : i32 to vector<8x128xi32>
    %25 = arith.muli %23, %24 : vector<8x128xi32>
    %c15_i32_3 = arith.constant 15 : i32
    %26 = vector.broadcast %c15_i32_3 : i32 to vector<8x128xi32>
    %27 = arith.shrui %25, %26 : vector<8x128xi32>
    %28 = arith.xori %25, %27 : vector<8x128xi32>
    %c-2073254261_i32_4 = arith.constant -2073254261 : i32
    %29 = vector.broadcast %c-2073254261_i32_4 : i32 to vector<8x128xi32>
    %30 = arith.muli %28, %29 : vector<8x128xi32>
    %c16_i32_5 = arith.constant 16 : i32
    %31 = vector.broadcast %c16_i32_5 : i32 to vector<8x128xi32>
    %32 = arith.shrui %30, %31 : vector<8x128xi32>
    %33 = arith.xori %30, %32 : vector<8x128xi32>
    %c1_i32 = arith.constant 1 : i32
    %34 = vector.broadcast %c1_i32 : i32 to vector<8x128xi32>
    %35 = arith.addi %20, %34 : vector<8x128xi32>
    %c16_i32_6 = arith.constant 16 : i32
    %36 = vector.broadcast %c16_i32_6 : i32 to vector<8x128xi32>
    %37 = arith.shrui %35, %36 : vector<8x128xi32>
    %38 = arith.xori %35, %37 : vector<8x128xi32>
    %c2146121005_i32_7 = arith.constant 2146121005 : i32
    %39 = vector.broadcast %c2146121005_i32_7 : i32 to vector<8x128xi32>
    %40 = arith.muli %38, %39 : vector<8x128xi32>
    %c15_i32_8 = arith.constant 15 : i32
    %41 = vector.broadcast %c15_i32_8 : i32 to vector<8x128xi32>
    %42 = arith.shrui %40, %41 : vector<8x128xi32>
    %43 = arith.xori %40, %42 : vector<8x128xi32>
    %c-2073254261_i32_9 = arith.constant -2073254261 : i32
    %44 = vector.broadcast %c-2073254261_i32_9 : i32 to vector<8x128xi32>
    %45 = arith.muli %43, %44 : vector<8x128xi32>
    %c16_i32_10 = arith.constant 16 : i32
    %46 = vector.broadcast %c16_i32_10 : i32 to vector<8x128xi32>
    %47 = arith.shrui %45, %46 : vector<8x128xi32>
    %48 = arith.xori %45, %47 : vector<8x128xi32>
    %c8_i32 = arith.constant 8 : i32
    %49 = vector.broadcast %c8_i32 : i32 to vector<8x128xi32>
    %50 = arith.shrui %33, %49 : vector<8x128xi32>
    %51 = arith.uitofp %50 : vector<8x128xi32> to vector<8x128xf32>
    %cst = arith.constant 5.000000e-01 : f32
    %52 = vector.broadcast %cst : f32 to vector<8x128xf32>
    %53 = arith.addf %51, %52 : vector<8x128xf32>
    %cst_11 = arith.constant 5.96046448E-8 : f32
    %54 = vector.broadcast %cst_11 : f32 to vector<8x128xf32>
    %55 = arith.mulf %53, %54 : vector<8x128xf32>
    %c8_i32_12 = arith.constant 8 : i32
    %56 = vector.broadcast %c8_i32_12 : i32 to vector<8x128xi32>
    %57 = arith.shrui %48, %56 : vector<8x128xi32>
    %58 = arith.uitofp %57 : vector<8x128xi32> to vector<8x128xf32>
    %cst_13 = arith.constant 5.000000e-01 : f32
    %59 = vector.broadcast %cst_13 : f32 to vector<8x128xf32>
    %60 = arith.addf %58, %59 : vector<8x128xf32>
    %cst_14 = arith.constant 5.96046448E-8 : f32
    %61 = vector.broadcast %cst_14 : f32 to vector<8x128xf32>
    %62 = arith.mulf %60, %61 : vector<8x128xf32>
    %63 = math.log %55 : vector<8x128xf32>
    %cst_15 = arith.constant -2.000000e+00 : f32
    %64 = vector.broadcast %cst_15 : f32 to vector<8x128xf32>
    %65 = arith.mulf %64, %63 : vector<8x128xf32>
    %66 = math.sqrt %65 : vector<8x128xf32>
    %cst_16 = arith.constant 6.28318548 : f32
    %67 = vector.broadcast %cst_16 : f32 to vector<8x128xf32>
    %68 = arith.mulf %67, %62 : vector<8x128xf32>
    %69 = math.cos %68 : vector<8x128xf32>
    %70 = arith.mulf %66, %69 : vector<8x128xf32>
    %71 = math.sin %68 : vector<8x128xf32>
    %72 = arith.mulf %66, %71 : vector<8x128xf32>
    %73 = tpu.concatenate %70, %72 in 0 : vector<8x128xf32>, vector<8x128xf32> -> vector<16x128xf32>
    %cst_17 = arith.constant 1.000000e-01 : f32
    %74 = vector.broadcast %cst_17 : f32 to vector<16x128xf32>
    %75 = arith.mulf %74, %73 : vector<16x128xf32>
    %cst_18 = arith.constant 0.000000e+00 : f32
    %76 = vector.broadcast %cst_18 : f32 to vector<16x128xf32>
    %77 = arith.addf %76, %75 : vector<16x128xf32>
    %c0_19 = arith.constant 0 : index
    %c0_20 = arith.constant 0 : index
    %78 = vector.load %arg2[%c0_19, %c0_20] : memref<16x128xf32, #tpu.memory_space<vmem>>, vector<16x128xf32>
    %79 = arith.addf %78, %77 : vector<16x128xf32>
    %c0_21 = arith.constant 0 : index
    %c0_22 = arith.constant 0 : index
    %80 = vector.load %arg3[%c0_21, %c0_22] : memref<16x128xf32, #tpu.memory_space<vmem>>, vector<16x128xf32>
    tpu.vector_store %arg3[%c0_21, %c0_22], %79 {strides = array<i32>} : memref<16x128xf32, #tpu.memory_space<vmem>>, vector<16x128xf32>,
    return
  }
  func.func @transform_0(%arg0: i32) -> i32 {
    %c0_i32 = arith.constant 0 : i32
    %c0_i32_0 = arith.constant 0 : i32
    return %c0_i32 : i32
  }
  func.func @transform_1(%arg0: i32) -> (i32, i32) {
    %c0_i32 = arith.constant 0 : i32
    %c0_i32_0 = arith.constant 0 : i32
    return %arg0, %c0_i32 : i32, i32
  }
  func.func @transform_2(%arg0: i32) -> (i32, i32) {
    %c0_i32 = arith.constant 0 : i32
    %c0_i32_0 = arith.constant 0 : i32
    return %arg0, %c0_i32 : i32, i32
  }
}

</mosaic_0001>

<llo_original>
// kernel: tpu_custom_call.1
$region0: #{tpu_custom_call.1}
  #allocation0 [shape = 'u32[]', space=smem, size = 0x4, offset = 0x4, fixed_abs, tag = 'smem constant byte address 0x4 - core index']
  #allocation1 [shape = 'u32[144,128]{1,0:T(1,128)}', space=vmem, size = 0x12000, scoped, tag = 'internal scratch']
  #allocation2 [shape = 's32[1]{0:T(128)S(6)}', space=smem, size = 0x200, scoped, tag = 'scoped memory for tpu_custom_call.1']
  %s0 = inlined_call_operand.<no memory space> [shape: s32[1], index: 0, kind: input, shape index: {}]
  %s1 = inlined_call_operand.hbm [shape: f32[16,128], index: 1, kind: input, shape index: {}]
  %s2 = inlined_call_operand.hbm [shape: f32[16,128], index: 2, kind: output, shape index: {}]
  %s3 = sld [smem:[#allocation0]]
  $region22: #{tpu_custom_call.1} parent=0
    _
  %s5 = ssub.s32 1, %s3
  %s6 = scalar_select 0, %s5, %s3
  %7 = sst [smem:[#allocation2]] %s0
  $region1: #{tpu_custom_call.1} parent=0
    #allocation3 [shape = 'u8[8192]{0}', space=vmem, size = 0x2000, scoped, tag = 'input window, operand 1, single buffered']
    #allocation4 [shape = 's32[1]{0}', space=sflag, size = 0x4, scoped, tag = 'scoped memory for tpu_custom_call.1']
    #allocation5 [shape = 's32[1]{0}', space=sflag, size = 0x4, scoped, tag = 'scoped memory for tpu_custom_call.1']
    #allocation6 [shape = 'u8[8192]{0}', space=vmem, size = 0x2000, scoped, tag = 'output window, operand 0, single buffered']
    %8 = vsyncpa [#allocation4], 0
    %9 = vsyncpa [#allocation5], 0
    // Predicated region
    $region2: #{tpu_custom_call.1} parent=1 // pred_check
      _
    $region3: #{tpu_custom_call.1} parent=1 // pred_check_branch
      %11 = sbr.rel (0) target = $region5
    $region4: #{tpu_custom_call.1} parent=1 // pred_region
      _
    $region5: #{tpu_custom_call.1} parent=1 // pred_fallthru
      _
    // Predicated region
    $region6: #{tpu_custom_call.1} parent=1 // pred_check
      _
    $region7: #{tpu_custom_call.1} parent=1 // pred_check_branch
      %13 = sbr.rel (0) target = $region9
    $region8: #{tpu_custom_call.1} parent=1 // pred_region
      %s15 = ssub.s32 256, 256
      %16 = vsyncadd [#allocation4], %s15
      %s17 = sshll.u32 [#allocation3], 4
      %s18 = int_to_ptr.vmem [resolvable:$true] %s17
      %23 = dma.hbm_to_vmem [thread:$0]  %s1, 256, %s18, [#allocation4], 128, 128, 8
    $region9: #{tpu_custom_call.1} parent=1 // pred_fallthru
      _
    // Predicated region
    $region10: #{tpu_custom_call.1} parent=1 // pred_check
      _
    $region11: #{tpu_custom_call.1} parent=1 // pred_check_branch
      %25 = sbr.rel (0) target = $region13
    $region12: #{tpu_custom_call.1} parent=1 // pred_region
      %26 = dma.done [#allocation4], 256
    $region13: #{tpu_custom_call.1} parent=1 // pred_fallthru
      _
    %v27 = vlaneseq
    %v28 = vshrl.u32 %v27, 7
    %v29 = vlaneseq
    %v30 = vand.u32 %v29, 127
    %v31 = vmul.u32 %v28, 128
    %v32 = vadd.s32 %v31, %v30
    %s33 = smul.u32 0, 1024
    %v34 = vstv %s33
    %v35 = vadd.s32 %v34, %v32
    %s36 = sld [smem:[#allocation2]]
    %s37 = sshrl.u32 %s36, 16
    %s38 = sxor.u32 %s36, %s37
    %s39 = smul.u32 %s38, 2146121005
    %s40 = sshrl.u32 %s39, 15
    %s41 = sxor.u32 %s39, %s40
    %s42 = smul.u32 %s41, 2221713035
    %s43 = sshrl.u32 %s42, 16
    %s44 = sxor.u32 %s42, %s43
    %v45 = vmul.u32 %v35, 2
    %v46 = vstv %s44
    %v47 = vadd.s32 %v45, %v46
    %v48 = vshrl.u32 %v47, 16
    %v49 = vxor.u32 %v47, %v48
    %v50 = vmul.u32 %v49, 2146121005
    %v51 = vshrl.u32 %v50, 15
    %v52 = vxor.u32 %v50, %v51
    %v53 = vmul.u32 %v52, 2221713035
    %v54 = vshrl.u32 %v53, 16
    %v55 = vxor.u32 %v53, %v54
    %v56 = vadd.s32 %v47, 1
    %v57 = vshrl.u32 %v56, 16
    %v58 = vxor.u32 %v56, %v57
    %v59 = vmul.u32 %v58, 2146121005
    %v60 = vshrl.u32 %v59, 15
    %v61 = vxor.u32 %v59, %v60
    %v62 = vmul.u32 %v61, 2221713035
    %v63 = vshrl.u32 %v62, 16
    %v64 = vxor.u32 %v62, %v63
    %v65 = vshrl.u32 %v55, 8
    %v66 = vshrl.u32 %v65, 16
    %v67 = vand.u32 %v65, 65535
    %v68 = vcvt.s32.f32 %v66
    %v69 = vmul.f32 %v68, 65536.0
    %v70 = vcvt.s32.f32 %v67
    %v71 = vadd.f32 %v69, %v70
    %v72 = vadd.f32 %v71, 0.5
    %v73 = vmul.f32 %v72, 5.9604645e-08
    %v74 = vshrl.u32 %v64, 8
    %v75 = vshrl.u32 %v74, 16
    %v76 = vand.u32 %v74, 65535
    %v77 = vcvt.s32.f32 %v75
    %v78 = vmul.f32 %v77, 65536.0
    %v79 = vcvt.s32.f32 %v76
    %v80 = vadd.f32 %v78, %v79
    %v81 = vadd.f32 %v80, 0.5
    %v82 = vmul.f32 %v81, 5.9604645e-08
    %v83 = vlog2.pop %v73
    %v84 = vmul.f32 %v83, 0.6931472
    %v85 = vmul.f32 %v84, -2.0
    %v86 = vrsqrt.pop %v85
    %v87 = vmul.f32 %v85, %v86
    %vm88 = vcmp.eq.f32.partialorder %v85, inf
    %v89 = vsel %vm88, %v85, %v87
    %vm90 = vcmp.eq.f32.partialorder %v85, 0.0
    %v91 = vand.u32 %v85, 2147483648
    %v92 = vsel %vm90, %v91, %v89
    %v93 = vmul.f32 %v82, 6.2831855
    %v94 = vand.u32 2147483647, %v93
    %vm95 = vcmp.le.f32.partialorder %v94, 0.7853982
    %vm96 = vcmp.lt.s32.totalorder %v93, 0
    %v97 = vand.u32 %v93, 2139095040
    %v98 = vshrl.u32 %v97, 23
    %v99 = vsub.s32 %v98, 127
    %v100 = vand.u32 2147483647, %v93
    %v101 = vand.u32 %v100, 8388607
    %v102 = vor.u32 %v101, 8388608
    %v103 = vsub.s32 0, %v102
    %v104 = vadd.s32 %v99, 1
    %vm105 = vcmp.gt.s32.totalorder %v104, 0
    %v106 = vsel %vm105, %v104, 0
    %v107 = vshrl.u32 %v106, 5
    %v108 = vand.u32 %v106, 31
    %v109 = vsub.s32 32, %v108
    %v110 = vshrl.u32 683565275, %v109
    %v111 = vshll.u32 683565275, %v108
    %v112 = vshrl.u32 2475754826, %v109
    %v113 = vor.u32 %v111, %v112
    %v114 = vshll.u32 2475754826, %v108
    %v115 = vshrl.u32 2131351028, %v109
    %v116 = vor.u32 %v114, %v115
    %v117 = vshll.u32 2131351028, %v108
    %v118 = vshrl.u32 2102212464, %v109
    %v119 = vor.u32 %v117, %v118
    %v120 = vshll.u32 2102212464, %v108
    %v121 = vshrl.u32 920167782, %v109
    %v122 = vor.u32 %v120, %v121
    %v123 = vshll.u32 920167782, %v108
    %v124 = vshrl.u32 1326507024, %v109
    %v125 = vor.u32 %v123, %v124
    %vm126 = vcmp.lt.s32.totalorder %v107, 1
    %vm127 = vcmp.lt.s32.totalorder %v107, 2
    %vm128 = vcmp.lt.s32.totalorder %v107, 3
    %vm129 = vcmp.lt.s32.totalorder %v107, 4
    %v130 = vsel %vm126, %v110, %v113
    %v131 = vsel %vm129, %v119, 2102212464
    %v132 = vsel %vm128, %v116, %v131
    %v133 = vsel %vm127, %v130, %v132
    %v134 = vsel %vm126, %v113, %v116
    %v135 = vsel %vm129, %v122, 920167782
    %v136 = vsel %vm128, %v119, %v135
    %v137 = vsel %vm127, %v134, %v136
    %v138 = vsel %vm126, %v116, %v119
    %v139 = vsel %vm129, %v125, 1326507024
    %v140 = vsel %vm128, %v122, %v139
    %v141 = vsel %vm127, %v138, %v140
    %v142 = vshll.u32 %v102, 8
    %v143 = vmul.u32.u64.compose %v142, %v141
    %v144 = vextract.low.u32 %v143
    %v145 = vextract.high.u32 %v143
    %v146 = vmul.u32.u64.compose %v142, %v137
    %v147 = vextract.low.u32 %v146
    %v148 = vextract.high.u32 %v146
    %v149 = vmul.u32 %v142, %v133
    %v150 = vadd.s32 %v145, %v147
    %vm151 = vc.u32 %v145, %v147
    %v152 = vadd.s32 %v148, 1
    %v153 = vsel %vm151, %v152, %v148
    %v154 = vadd.s32 %v149, %v153
    %v155 = vadd.s32 %v154, 536870912
    %v156 = vshrl.u32 %v155, 30
    %v157 = vshll.u32 %v156, 30
    %v158 = vsub.s32 %v154, %v157
    %vm159 = vcmp.lt.s32.totalorder %v158, 0
    %v160 = vsub.s32 0, %v158
    %v161 = vsel %vm159, %v160, %v158
    %v162 = vclz %v161
    %v163 = vsub.s32 %v162, 2
    %vm164 = vcmp.gt.s32.totalorder 0, %v163
    %v165 = vsel %vm164, 0, %v163
    %v166 = vsub.s32 32, %v165
    %v167 = vshll.u32 %v158, %v165
    %v168 = vshrl.u32 %v150, %v166
    %v169 = vor.u32 %v167, %v168
    %v170 = vsub.s32 4294967266, %v165
    %v171 = vadd.s32 %v170, 127
    %v172 = vshll.u32 %v171, 23
    %v173 = vor.u32 4788187, %v172
    %v174 = vand.u32 2147483647, %v173
    %v176 = vcvt.s32.f32 %v169
    %v177 = vmul.f32 %v176, %v174
    %v178 = vxor.u32 %v177, 2147483648
    %v179 = vsel %vm96, %v178, %v177
    %v180 = vsub.s32 4, %v156
    %v181 = vsel %vm96, %v180, %v156
    %v182 = vsel %vm95, %v93, %v179
    %v183 = vsel %vm95, 0, %v181
    %v184 = vcosq.f32.pop %v182
    %v185 = vsinq.f32.pop %v182
    %vm186 = vweird.f32 %v93
    %v187 = vand.u32 %v183, 3
    %vm188 = vcmp.lt.s32.totalorder %v187, 2
    %vm189 = vcmp.eq.s32.totalorder %v187, 0
    %v190 = vxor.u32 %v185, 2147483648
    %v191 = vsel %vm189, %v184, %v190
    %vm192 = vcmp.eq.s32.totalorder %v187, 2
    %v193 = vxor.u32 %v184, 2147483648
    %v194 = vsel %vm192, %v193, %v185
    %v195 = vsel %vm188, %v191, %v194
    %v196 = vsel %vm186, nan, %v195
    %v197 = vmul.f32 %v92, %v196
    %v198 = vand.u32 2147483647, %v93
    %vm199 = vcmp.le.f32.partialorder %v198, 0.7853982
    %vm200 = vcmp.lt.s32.totalorder %v93, 0
    %v201 = vand.u32 %v93, 2139095040
    %v202 = vshrl.u32 %v201, 23
    %v203 = vsub.s32 %v202, 127
    %v204 = vand.u32 2147483647, %v93
    %v205 = vand.u32 %v204, 8388607
    %v206 = vor.u32 %v205, 8388608
    %v207 = vsub.s32 0, %v206
    %v208 = vadd.s32 %v203, 1
    %vm209 = vcmp.gt.s32.totalorder %v208, 0
    %v210 = vsel %vm209, %v208, 0
    %v211 = vshrl.u32 %v210, 5
    %v212 = vand.u32 %v210, 31
    %v213 = vsub.s32 32, %v212
    %v214 = vshrl.u32 683565275, %v213
    %v215 = vshll.u32 683565275, %v212
    %v216 = vshrl.u32 2475754826, %v213
    %v217 = vor.u32 %v215, %v216
    %v218 = vshll.u32 2475754826, %v212
    %v219 = vshrl.u32 2131351028, %v213
    %v220 = vor.u32 %v218, %v219
    %v221 = vshll.u32 2131351028, %v212
    %v222 = vshrl.u32 2102212464, %v213
    %v223 = vor.u32 %v221, %v222
    %v224 = vshll.u32 2102212464, %v212
    %v225 = vshrl.u32 920167782, %v213
    %v226 = vor.u32 %v224, %v225
    %v227 = vshll.u32 920167782, %v212
    %v228 = vshrl.u32 1326507024, %v213
    %v229 = vor.u32 %v227, %v228
    %vm230 = vcmp.lt.s32.totalorder %v211, 1
    %vm231 = vcmp.lt.s32.totalorder %v211, 2
    %vm232 = vcmp.lt.s32.totalorder %v211, 3
    %vm233 = vcmp.lt.s32.totalorder %v211, 4
    %v234 = vsel %vm230, %v214, %v217
    %v235 = vsel %vm233, %v223, 2102212464
    %v236 = vsel %vm232, %v220, %v235
    %v237 = vsel %vm231, %v234, %v236
    %v238 = vsel %vm230, %v217, %v220
    %v239 = vsel %vm233, %v226, 920167782
    %v240 = vsel %vm232, %v223, %v239
    %v241 = vsel %vm231, %v238, %v240
    %v242 = vsel %vm230, %v220, %v223
    %v243 = vsel %vm233, %v229, 1326507024
    %v244 = vsel %vm232, %v226, %v243
    %v245 = vsel %vm231, %v242, %v244
    %v246 = vshll.u32 %v206, 8
    %v247 = vmul.u32.u64.compose %v246, %v245
    %v248 = vextract.low.u32 %v247
    %v249 = vextract.high.u32 %v247
    %v250 = vmul.u32.u64.compose %v246, %v241
    %v251 = vextract.low.u32 %v250
    %v252 = vextract.high.u32 %v250
    %v253 = vmul.u32 %v246, %v237
    %v254 = vadd.s32 %v249, %v251
    %vm255 = vc.u32 %v249, %v251
    %v256 = vadd.s32 %v252, 1
    %v257 = vsel %vm255, %v256, %v252
    %v258 = vadd.s32 %v253, %v257
    %v259 = vadd.s32 %v258, 536870912
    %v260 = vshrl.u32 %v259, 30
    %v261 = vshll.u32 %v260, 30
    %v262 = vsub.s32 %v258, %v261
    %vm263 = vcmp.lt.s32.totalorder %v262, 0
    %v264 = vsub.s32 0, %v262
    %v265 = vsel %vm263, %v264, %v262
    %v266 = vclz %v265
    %v267 = vsub.s32 %v266, 2
    %vm268 = vcmp.gt.s32.totalorder 0, %v267
    %v269 = vsel %vm268, 0, %v267
    %v270 = vsub.s32 32, %v269
    %v271 = vshll.u32 %v262, %v269
    %v272 = vshrl.u32 %v254, %v270
    %v273 = vor.u32 %v271, %v272
    %v274 = vsub.s32 4294967266, %v269
    %v275 = vadd.s32 %v274, 127
    %v276 = vshll.u32 %v275, 23
    %v277 = vor.u32 4788187, %v276
    %v278 = vand.u32 2147483647, %v277
    %v280 = vcvt.s32.f32 %v273
    %v281 = vmul.f32 %v280, %v278
    %v282 = vxor.u32 %v281, 2147483648
    %v283 = vsel %vm200, %v282, %v281
    %v284 = vsub.s32 4, %v260
    %v285 = vsel %vm200, %v284, %v260
    %v286 = vsel %vm199, %v93, %v283
    %v287 = vsel %vm199, 0, %v285
    %v288 = vcosq.f32.pop %v286
    %v289 = vsinq.f32.pop %v286
    %vm290 = vweird.f32 %v93
    %v291 = vadd.s32 %v287, 3
    %v292 = vand.u32 %v291, 3
    %vm293 = vcmp.lt.s32.totalorder %v292, 2
    %vm294 = vcmp.eq.s32.totalorder %v292, 0
    %v295 = vxor.u32 %v289, 2147483648
    %v296 = vsel %vm294, %v288, %v295
    %vm297 = vcmp.eq.s32.totalorder %v292, 2
    %v298 = vxor.u32 %v288, 2147483648
    %v299 = vsel %vm297, %v298, %v289
    %v300 = vsel %vm293, %v296, %v299
    %v301 = vsel %vm290, nan, %v300
    %v302 = vmul.f32 %v92, %v301
    %v303 = vmul.f32 %v197, 0.1
    %v304 = vmul.f32 %v302, 0.1
    %v305 = vadd.f32 %v303, 0.0
    %v306 = vadd.f32 %v304, 0.0
    %v307 = vld [vmem:[#allocation3] sm:$0xff]
    %v308 = vld [vmem:[#allocation3 + $0x8] sm:$0xff]
    %v309 = vadd.f32 %v307, %v305
    %v310 = vadd.f32 %v308, %v306
    %311 = vst [vmem:[#allocation6] sm:$0xff] %v309
    %312 = vst [vmem:[#allocation6 + $0x8] sm:$0xff] %v310
    // Predicated region
    $region14: #{tpu_custom_call.1} parent=1 // pred_check
      _
    $region15: #{tpu_custom_call.1} parent=1 // pred_check_branch
      %314 = sbr.rel (0) target = $region17
    $region16: #{tpu_custom_call.1} parent=1 // pred_region
      %s316 = ssub.s32 256, 256
      %317 = vsyncadd [#allocation5], %s316
      %s318 = sshll.u32 [#allocation6], 4
      %s319 = int_to_ptr.vmem [resolvable:$true] %s318
      %324 = dma.vmem_to_hbm [thread:$0]  %s319, 256, %s2, [#allocation5], 128, 128, 8
    $region17: #{tpu_custom_call.1} parent=1 // pred_fallthru
      _
    // Predicated region
    $region18: #{tpu_custom_call.1} parent=1 // pred_check
      _
    $region19: #{tpu_custom_call.1} parent=1 // pred_check_branch
      %326 = sbr.rel (0) target = $region21
    $region20: #{tpu_custom_call.1} parent=1 // pred_region
      %327 = dma.done [#allocation5], 256
    $region21: #{tpu_custom_call.1} parent=1 // pred_fallthru
      _
    %328 = vsyncpa [#allocation4], 1
    %329 = vsyncpa [#allocation5], 1

</llo_original>
